<compile_context>
chip_gen: v5e
topology: v5e:2x2
jax: 0.10.0
libtpu: 0.0.40
codegen_flags: <defaults>
</compile_context>

<pallas_src>
import jax
import jax.numpy as jnp
from jax.experimental import pallas as pl
from jax.experimental.pallas import tpu as pltpu


def _layernorm(x, gamma, beta, eps=1e-5):
    mean = jnp.mean(x, axis=-1, keepdims=True)
    var = jnp.mean((x - mean) ** 2, axis=-1, keepdims=True)
    return (x - mean) * jax.lax.rsqrt(var + eps) * gamma + beta


def dummy_kernel(x_ref, vec_ref, w1_ref, w2_ref, pool_ref, o_ref):
    tb, L, C = x_ref.shape
    H = w1_ref.shape[1]

    # Flatten the batch block to rows once; all pre-pooling math is row-wise.
    x = x_ref[...].reshape(tb * L, C)          # (rows, 3)

    # Packed parameter tile: rows 0..C-1 = w_emb, then b1,g1,be1,b2,g2,be2, rest padding.
    vecs = vec_ref[...]
    w_emb = vecs[0:C, :]
    off = C
    b1, g1, be1 = vecs[off + 0:off + 1, :], vecs[off + 1:off + 2, :], vecs[off + 2:off + 3, :]
    b2, g2, be2 = vecs[off + 3:off + 4, :], vecs[off + 4:off + 5, :], vecs[off + 5:off + 6, :]

    # sequence_embedding: Linear(3 -> H, bias=False) + Tanh.
    # K=3 wastes almost the whole MXU contraction depth, so do it as VPU broadcast-MACs.
    h = x[:, 0:1] * w_emb[0:1, :]
    for c in range(1, C):
        h = h + x[:, c:c + 1] * w_emb[c:c + 1, :]
    h = jnp.tanh(h)                            # (rows, H) f32

    # backbone block 1: Linear(H,H)+Tanh -> LayerNorm(H)
    h = jnp.tanh(jnp.dot(h, w1_ref[...], preferred_element_type=jnp.float32) + b1)
    h = _layernorm(h, g1, be1)

    # backbone block 2: Linear(H,H)+Tanh -> LayerNorm(H)
    h = jnp.tanh(jnp.dot(h, w2_ref[...], preferred_element_type=jnp.float32) + b2)
    h = _layernorm(h, g2, be2)

    # Rearrange B L D -> B D L ; Linear(L -> 1, bias=False) ; Rearrange back.
    # == per-batch weighted sum over L: scale rows by their pool weight (VPU lane-broadcast
    # multiply), then a short sublane reduction over L per batch element (XLU).
    h3 = h.reshape(tb, L, H)
    pooled = jnp.sum(h3 * pool_ref[...], axis=1)            # (tb,L,H)*(L,1) -> sum_L -> (tb,H)
    o_ref[...] = pooled.astype(o_ref.dtype)


def dummy_forward(waveform_seq, params, tb=None):
    B, L, C = waveform_seq.shape
    H = params["w_emb"].shape[1]

    if tb is None:
        # Batch-block size: at small shapes take the whole batch in one grid step; for
        # large shapes cap the resident (tb*L, H) f32 activation to ~8 MiB of VMEM.
        rows_budget = (8 * 1024 * 1024) // max(1, 4 * H)
        tb = max(1, min(B, rows_budget // max(1, L)))
        while B % tb != 0:
            tb -= 1
    assert B % tb == 0, "batch block size must divide B"

    # Pack w_emb (C rows) + six (1, H) bias / LayerNorm vectors into one sublane-aligned tile.
    used_rows = C + 6
    pad_rows = (-used_rows) % 8
    vecs = jnp.concatenate(
        [params["w_emb"],
         params["b1"], params["g1"], params["be1"],
         params["b2"], params["g2"], params["be2"],
         jnp.zeros((pad_rows, H), jnp.float32)],
        axis=0,
    )  # (used_rows + pad_rows, H)

    pool_col = params["w_pool"].astype(jnp.float32)          # (L, 1)

    const = lambda shape: pl.BlockSpec(shape, lambda i, _s=shape: (0,) * len(_s))

    out2d = pl.pallas_call(
        dummy_kernel,
        out_shape=jax.ShapeDtypeStruct((B, H), jnp.float32),
        grid_spec=pltpu.PrefetchScalarGridSpec(
            num_scalar_prefetch=0,
            grid=(B // tb,),
            in_specs=[
                pl.BlockSpec((tb, L, C), lambda i: (i, 0, 0)),  # waveform block
                const((used_rows + pad_rows, H)),               # packed w_emb/b/gamma/beta
                const((H, H)),                                  # w1
                const((H, H)),                                  # w2
                const((L, 1)),                                  # pooling weights
            ],
            out_specs=pl.BlockSpec((tb, H), lambda i: (i, 0)),  # lane-dense 2-D output
        ),
        compiler_params=pltpu.CompilerParams(dimension_semantics=("parallel",)),
    )(
        waveform_seq,
        vecs, params["w1"], params["w2"], pool_col,
    )

    return out2d.reshape(B, 1, H)


def reference_forward(x, p):
    h = jnp.tanh(x @ p["w_emb"])
    h = jnp.tanh(h @ p["w1"] + p["b1"])
    h = _layernorm(h, p["g1"], p["be1"])
    h = jnp.tanh(h @ p["w2"] + p["b2"])
    h = _layernorm(h, p["g2"], p["be2"])
    # (B, L, H) -> weighted sum over L with (L, 1) weights -> (B, 1, H)
    return jnp.sum(h * p["w_pool"][None, :, :], axis=1, keepdims=True)


def make_params(key, hidden_size, max_length):
    ks = jax.random.split(key, 6)
    scale = 0.1
    return {
        "w_emb": scale * jax.random.normal(ks[0], (3, hidden_size), jnp.float32),
        "w1": scale * jax.random.normal(ks[1], (hidden_size, hidden_size), jnp.float32),
        "b1": scale * jax.random.normal(ks[2], (1, hidden_size), jnp.float32),
        "g1": jnp.ones((1, hidden_size), jnp.float32),
        "be1": jnp.zeros((1, hidden_size), jnp.float32),
        "w2": scale * jax.random.normal(ks[3], (hidden_size, hidden_size), jnp.float32),
        "b2": scale * jax.random.normal(ks[4], (1, hidden_size), jnp.float32),
        "g2": jnp.ones((1, hidden_size), jnp.float32),
        "be2": jnp.zeros((1, hidden_size), jnp.float32),
        "w_pool": scale * jax.random.normal(ks[5], (max_length, 1), jnp.float32),
    }


if __name__ == "__main__":
    B, L, H = 2, 8, 32   # batch, max_length (seq), hidden_size
    key = jax.random.PRNGKey(0)
    k_x, k_p = jax.random.split(key)

    waveform_seq = jax.random.normal(k_x, (B, L, 3), jnp.float32)
    params = make_params(k_p, H, L)

    out = jax.block_until_ready(dummy_forward(waveform_seq, params))
    ref = jax.block_until_ready(reference_forward(waveform_seq, params))

    assert out.shape == (B, 1, H), out.shape
    assert jnp.allclose(out, ref, atol=1e-5, rtol=1e-5), "mismatch vs pure-JAX reference"
    print("KERNEL_OK")
</pallas_src>

<mosaic_0001>
module attributes {stable_mosaic.version = 11 : i64} {
  func.func @dummy_kernel(%arg0: i32, %arg1: memref<2x8x3xf32, #tpu.memory_space<vmem>>, %arg2: memref<16x32xf32, #tpu.memory_space<vmem>>, %arg3: memref<32x32xf32, #tpu.memory_space<vmem>>, %arg4: memref<32x32xf32, #tpu.memory_space<vmem>>, %arg5: memref<8x1xf32, #tpu.memory_space<vmem>>, %arg6: memref<2x32xf32, #tpu.memory_space<vmem>>) attributes {dimension_semantics = [#tpu.dimension_semantics<parallel>], iteration_bounds = array<i64: 1>, scalar_prefetch = 0 : i64, scratch_operands = 0 : i64, tpu.core_type = #tpu.core_type<tc>, window_params = [{transform_indices = @transform_0, window_bounds = array<i64: 2, 8, 3>}, {pipeline_mode = #tpu.pipeline_mode<synchronous>, transform_indices = @transform_1, window_bounds = array<i64: 16, 32>}, {pipeline_mode = #tpu.pipeline_mode<synchronous>, transform_indices = @transform_2, window_bounds = array<i64: 32, 32>}, {pipeline_mode = #tpu.pipeline_mode<synchronous>, transform_indices = @transform_3, window_bounds = array<i64: 32, 32>}, {pipeline_mode = #tpu.pipeline_mode<synchronous>, transform_indices = @transform_4, window_bounds = array<i64: 8, 1>}, {transform_indices = @transform_5, window_bounds = array<i64: 2, 32>}]} {
    %c0 = arith.constant 0 : index
    %c0_0 = arith.constant 0 : index
    %c0_1 = arith.constant 0 : index
    %0 = vector.load %arg1[%c0, %c0_0, %c0_1] : memref<2x8x3xf32, #tpu.memory_space<vmem>>, vector<2x8x3xf32>
    %1 = vector.shape_cast %0 : vector<2x8x3xf32> to vector<16x3xf32>
    %c0_2 = arith.constant 0 : index
    %c0_3 = arith.constant 0 : index
    %2 = vector.load %arg2[%c0_2, %c0_3] : memref<16x32xf32, #tpu.memory_space<vmem>>, vector<16x32xf32>
    %3 = vector.extract_strided_slice %2 {offsets = [0, 0], sizes = [3, 32], strides = [1, 1]} : vector<16x32xf32> to vector<3x32xf32>
    %4 = vector.extract_strided_slice %2 {offsets = [3, 0], sizes = [1, 32], strides = [1, 1]} : vector<16x32xf32> to vector<1x32xf32>
    %5 = vector.extract_strided_slice %2 {offsets = [4, 0], sizes = [1, 32], strides = [1, 1]} : vector<16x32xf32> to vector<1x32xf32>
    %6 = vector.extract_strided_slice %2 {offsets = [5, 0], sizes = [1, 32], strides = [1, 1]} : vector<16x32xf32> to vector<1x32xf32>
    %7 = vector.extract_strided_slice %2 {offsets = [6, 0], sizes = [1, 32], strides = [1, 1]} : vector<16x32xf32> to vector<1x32xf32>
    %8 = vector.extract_strided_slice %2 {offsets = [7, 0], sizes = [1, 32], strides = [1, 1]} : vector<16x32xf32> to vector<1x32xf32>
    %9 = vector.extract_strided_slice %2 {offsets = [8, 0], sizes = [1, 32], strides = [1, 1]} : vector<16x32xf32> to vector<1x32xf32>
    %10 = vector.extract_strided_slice %1 {offsets = [0, 0], sizes = [16, 1], strides = [1, 1]} : vector<16x3xf32> to vector<16x1xf32>
    %11 = vector.extract_strided_slice %3 {offsets = [0, 0], sizes = [1, 32], strides = [1, 1]} : vector<3x32xf32> to vector<1x32xf32>
    %12 = vector.broadcast %10 : vector<16x1xf32> to vector<16x32xf32>
    %13 = vector.broadcast %11 : vector<1x32xf32> to vector<16x32xf32>
    %14 = arith.mulf %12, %13 : vector<16x32xf32>
    %15 = vector.extract_strided_slice %1 {offsets = [0, 1], sizes = [16, 1], strides = [1, 1]} : vector<16x3xf32> to vector<16x1xf32>
    %16 = vector.extract_strided_slice %3 {offsets = [1, 0], sizes = [1, 32], strides = [1, 1]} : vector<3x32xf32> to vector<1x32xf32>
    %17 = vector.broadcast %15 : vector<16x1xf32> to vector<16x32xf32>
    %18 = vector.broadcast %16 : vector<1x32xf32> to vector<16x32xf32>
    %19 = arith.mulf %17, %18 : vector<16x32xf32>
    %20 = arith.addf %14, %19 : vector<16x32xf32>
    %21 = vector.extract_strided_slice %1 {offsets = [0, 2], sizes = [16, 1], strides = [1, 1]} : vector<16x3xf32> to vector<16x1xf32>
    %22 = vector.extract_strided_slice %3 {offsets = [2, 0], sizes = [1, 32], strides = [1, 1]} : vector<3x32xf32> to vector<1x32xf32>
    %23 = vector.broadcast %21 : vector<16x1xf32> to vector<16x32xf32>
    %24 = vector.broadcast %22 : vector<1x32xf32> to vector<16x32xf32>
    %25 = arith.mulf %23, %24 : vector<16x32xf32>
    %26 = arith.addf %20, %25 : vector<16x32xf32>
    %27 = math.tanh %26 : vector<16x32xf32>
    %c0_4 = arith.constant 0 : index
    %c0_5 = arith.constant 0 : index
    %28 = vector.load %arg3[%c0_4, %c0_5] : memref<32x32xf32, #tpu.memory_space<vmem>>, vector<32x32xf32>
    %cst = arith.constant dense<0.000000e+00> : vector<16x32xf32>
    %29 = tpu.matmul %27, %28, %cst {dimension_numbers = #tpu.dot_dimension_numbers<[1], [0], [0], [1], [0, 0, 1, 1], [], []>} : vector<16x32xf32>, vector<32x32xf32>, vector<16x32xf32> -> vector<16x32xf32>
    %30 = vector.broadcast %4 : vector<1x32xf32> to vector<16x32xf32>
    %31 = arith.addf %29, %30 : vector<16x32xf32>
    %32 = math.tanh %31 : vector<16x32xf32>
    %cst_6 = arith.constant dense<0.000000e+00> : vector<16xf32>
    %33 = vector.multi_reduction <add>, %32, %cst_6 [1] : vector<16x32xf32> to vector<16xf32>
    %34 = vector.shape_cast %33 : vector<16xf32> to vector<16x1xf32>
    %cst_7 = arith.constant 3.200000e+01 : f32
    %35 = vector.broadcast %cst_7 : f32 to vector<16x1xf32>
    %36 = arith.divf %34, %35 : vector<16x1xf32>
    %37 = vector.broadcast %36 : vector<16x1xf32> to vector<16x32xf32>
    %38 = arith.subf %32, %37 : vector<16x32xf32>
    %39 = arith.mulf %38, %38 : vector<16x32xf32>
    %cst_8 = arith.constant dense<0.000000e+00> : vector<16xf32>
    %40 = vector.multi_reduction <add>, %39, %cst_8 [1] : vector<16x32xf32> to vector<16xf32>
    %41 = vector.shape_cast %40 : vector<16xf32> to vector<16x1xf32>
    %cst_9 = arith.constant 3.200000e+01 : f32
    %42 = vector.broadcast %cst_9 : f32 to vector<16x1xf32>
    %43 = arith.divf %41, %42 : vector<16x1xf32>
    %44 = vector.broadcast %36 : vector<16x1xf32> to vector<16x32xf32>
    %45 = arith.subf %32, %44 : vector<16x32xf32>
    %cst_10 = arith.constant 9.99999974E-6 : f32
    %46 = vector.broadcast %cst_10 : f32 to vector<16x1xf32>
    %47 = arith.addf %43, %46 : vector<16x1xf32>
    %48 = math.rsqrt %47 : vector<16x1xf32>
    %49 = vector.broadcast %48 : vector<16x1xf32> to vector<16x32xf32>
    %50 = arith.mulf %45, %49 : vector<16x32xf32>
    %51 = vector.broadcast %5 : vector<1x32xf32> to vector<16x32xf32>
    %52 = arith.mulf %50, %51 : vector<16x32xf32>
    %53 = vector.broadcast %6 : vector<1x32xf32> to vector<16x32xf32>
    %54 = arith.addf %52, %53 : vector<16x32xf32>
    %c0_11 = arith.constant 0 : index
    %c0_12 = arith.constant 0 : index
    %55 = vector.load %arg4[%c0_11, %c0_12] : memref<32x32xf32, #tpu.memory_space<vmem>>, vector<32x32xf32>
    %cst_13 = arith.constant dense<0.000000e+00> : vector<16x32xf32>
    %56 = tpu.matmul %54, %55, %cst_13 {dimension_numbers = #tpu.dot_dimension_numbers<[1], [0], [0], [1], [0, 0, 1, 1], [], []>} : vector<16x32xf32>, vector<32x32xf32>, vector<16x32xf32> -> vector<16x32xf32>
    %57 = vector.broadcast %7 : vector<1x32xf32> to vector<16x32xf32>
    %58 = arith.addf %56, %57 : vector<16x32xf32>
    %59 = math.tanh %58 : vector<16x32xf32>
    %cst_14 = arith.constant dense<0.000000e+00> : vector<16xf32>
    %60 = vector.multi_reduction <add>, %59, %cst_14 [1] : vector<16x32xf32> to vector<16xf32>
    %61 = vector.shape_cast %60 : vector<16xf32> to vector<16x1xf32>
    %cst_15 = arith.constant 3.200000e+01 : f32
    %62 = vector.broadcast %cst_15 : f32 to vector<16x1xf32>
    %63 = arith.divf %61, %62 : vector<16x1xf32>
    %64 = vector.broadcast %63 : vector<16x1xf32> to vector<16x32xf32>
    %65 = arith.subf %59, %64 : vector<16x32xf32>
    %66 = arith.mulf %65, %65 : vector<16x32xf32>
    %cst_16 = arith.constant dense<0.000000e+00> : vector<16xf32>
    %67 = vector.multi_reduction <add>, %66, %cst_16 [1] : vector<16x32xf32> to vector<16xf32>
    %68 = vector.shape_cast %67 : vector<16xf32> to vector<16x1xf32>
    %cst_17 = arith.constant 3.200000e+01 : f32
    %69 = vector.broadcast %cst_17 : f32 to vector<16x1xf32>
    %70 = arith.divf %68, %69 : vector<16x1xf32>
    %71 = vector.broadcast %63 : vector<16x1xf32> to vector<16x32xf32>
    %72 = arith.subf %59, %71 : vector<16x32xf32>
    %cst_18 = arith.constant 9.99999974E-6 : f32
    %73 = vector.broadcast %cst_18 : f32 to vector<16x1xf32>
    %74 = arith.addf %70, %73 : vector<16x1xf32>
    %75 = math.rsqrt %74 : vector<16x1xf32>
    %76 = vector.broadcast %75 : vector<16x1xf32> to vector<16x32xf32>
    %77 = arith.mulf %72, %76 : vector<16x32xf32>
    %78 = vector.broadcast %8 : vector<1x32xf32> to vector<16x32xf32>
    %79 = arith.mulf %77, %78 : vector<16x32xf32>
    %80 = vector.broadcast %9 : vector<1x32xf32> to vector<16x32xf32>
    %81 = arith.addf %79, %80 : vector<16x32xf32>
    %82 = vector.shape_cast %81 : vector<16x32xf32> to vector<2x8x32xf32>
    %c0_19 = arith.constant 0 : index
    %c0_20 = arith.constant 0 : index
    %83 = vector.load %arg5[%c0_19, %c0_20] : memref<8x1xf32, #tpu.memory_space<vmem>>, vector<8x1xf32>
    %84 = vector.shape_cast %83 : vector<8x1xf32> to vector<1x8x1xf32>
    %85 = vector.broadcast %84 : vector<1x8x1xf32> to vector<2x8x32xf32>
    %86 = arith.mulf %82, %85 : vector<2x8x32xf32>
    %cst_21 = arith.constant dense<0.000000e+00> : vector<2x32xf32>
    %87 = vector.multi_reduction <add>, %86, %cst_21 [1] : vector<2x8x32xf32> to vector<2x32xf32>
    %c0_22 = arith.constant 0 : index
    %c0_23 = arith.constant 0 : index
    %88 = vector.load %arg6[%c0_22, %c0_23] : memref<2x32xf32, #tpu.memory_space<vmem>>, vector<2x32xf32>
    tpu.vector_store %arg6[%c0_22, %c0_23], %87 {strides = array<i32>} : memref<2x32xf32, #tpu.memory_space<vmem>>, vector<2x32xf32>,
    return
  }
  func.func @transform_0(%arg0: i32) -> (i32, i32, i32) {
    %c0_i32 = arith.constant 0 : i32
    %c0_i32_0 = arith.constant 0 : i32
    %c0_i32_1 = arith.constant 0 : i32
    return %arg0, %c0_i32, %c0_i32_0 : i32, i32, i32
  }
  func.func @transform_1(%arg0: i32) -> (i32, i32) {
    %c0_i32 = arith.constant 0 : i32
    %c0_i32_0 = arith.constant 0 : i32
    %c0_i32_1 = arith.constant 0 : i32
    return %c0_i32, %c0_i32_0 : i32, i32
  }
  func.func @transform_2(%arg0: i32) -> (i32, i32) {
    %c0_i32 = arith.constant 0 : i32
    %c0_i32_0 = arith.constant 0 : i32
    %c0_i32_1 = arith.constant 0 : i32
    return %c0_i32, %c0_i32_0 : i32, i32
  }
  func.func @transform_3(%arg0: i32) -> (i32, i32) {
    %c0_i32 = arith.constant 0 : i32
    %c0_i32_0 = arith.constant 0 : i32
    %c0_i32_1 = arith.constant 0 : i32
    return %c0_i32, %c0_i32_0 : i32, i32
  }
  func.func @transform_4(%arg0: i32) -> (i32, i32) {
    %c0_i32 = arith.constant 0 : i32
    %c0_i32_0 = arith.constant 0 : i32
    %c0_i32_1 = arith.constant 0 : i32
    return %c0_i32, %c0_i32_0 : i32, i32
  }
  func.func @transform_5(%arg0: i32) -> (i32, i32) {
    %c0_i32 = arith.constant 0 : i32
    %c0_i32_0 = arith.constant 0 : i32
    return %arg0, %c0_i32 : i32, i32
  }
}

</mosaic_0001>

<llo_original>
// kernel: tpu_custom_call.1
$region0: #{tpu_custom_call.1}
  #allocation0 [shape = 'u32[]', space=smem, size = 0x4, offset = 0x4, fixed_abs, tag = 'smem constant byte address 0x4 - core index']
  #allocation1 [shape = 'u32[72,128]{1,0:T(1,128)}', space=vmem, size = 0x9000, scoped, tag = 'internal scratch']
  %s0 = inlined_call_operand.vmem [shape: f32[2,8,3], index: 0, kind: input, shape index: {}]
  %s1 = inlined_call_operand.vmem [shape: f32[16,32], index: 1, kind: input, shape index: {}]
  %s2 = inlined_call_operand.hbm [shape: f32[32,32], index: 2, kind: input, shape index: {}]
  %s3 = inlined_call_operand.hbm [shape: f32[32,32], index: 3, kind: input, shape index: {}]
  %s4 = inlined_call_operand.vmem [shape: f32[8,1], index: 4, kind: input, shape index: {}]
  %s5 = inlined_call_operand.hbm [shape: f32[2,32], index: 5, kind: output, shape index: {}]
  %s6 = sld [smem:[#allocation0]]
  $region38: #{tpu_custom_call.1} parent=0
    _
  %s8 = ssub.s32 1, %s6
  %s9 = scalar_select 0, %s8, %s6
  $region1: #{tpu_custom_call.1} parent=0
    #allocation2 [shape = 'u8[16384]{0}', space=vmem, size = 0x4000, scoped, tag = 'input window, operand 2, single buffered']
    #allocation3 [shape = 's32[1]{0}', space=sflag, size = 0x4, scoped, tag = 'scoped memory for tpu_custom_call.1']
    #allocation4 [shape = 's32[1]{0}', space=sflag, size = 0x4, scoped, tag = 'scoped memory for tpu_custom_call.1']
    #allocation5 [shape = 'u8[16384]{0}', space=vmem, size = 0x4000, scoped, tag = 'input window, operand 3, single buffered']
    #allocation6 [shape = 's32[1]{0}', space=sflag, size = 0x4, scoped, tag = 'scoped memory for tpu_custom_call.1']
    #allocation7 [shape = 'u8[1024]{0}', space=vmem, size = 0x400, scoped, tag = 'output window, operand 0, single buffered']
    %10 = vsyncpa [#allocation3], 0
    %11 = vsyncpa [#allocation6], 0
    %12 = vsyncpa [#allocation4], 0
    // Predicated region
    $region2: #{tpu_custom_call.1} parent=1 // pred_check
      _
    $region3: #{tpu_custom_call.1} parent=1 // pred_check_branch
      %14 = sbr.rel (0) target = $region5
    $region4: #{tpu_custom_call.1} parent=1 // pred_region
      _
    $region5: #{tpu_custom_call.1} parent=1 // pred_fallthru
      _
    // Predicated region
    $region6: #{tpu_custom_call.1} parent=1 // pred_check
      _
    $region7: #{tpu_custom_call.1} parent=1 // pred_check_branch
      %16 = sbr.rel (0) target = $region9
    $region8: #{tpu_custom_call.1} parent=1 // pred_region
      _
    $region9: #{tpu_custom_call.1} parent=1 // pred_fallthru
      _
    // Predicated region
    $region10: #{tpu_custom_call.1} parent=1 // pred_check
      _
    $region11: #{tpu_custom_call.1} parent=1 // pred_check_branch
      %18 = sbr.rel (0) target = $region13
    $region12: #{tpu_custom_call.1} parent=1 // pred_region
      %20 = vsyncadd [#allocation3], 0
      %s21 = sshll.u32 %s2, 4
      %s22 = int_to_ptr.hbm [resolvable:$true] %s21
      %s23 = sshll.u32 [#allocation2], 4
      %s24 = int_to_ptr.vmem [resolvable:$true] %s23
      %29 = dma.hbm_to_vmem [thread:$0]  %s22, 512, %s24, [#allocation3], 128, 128, 8
    $region13: #{tpu_custom_call.1} parent=1 // pred_fallthru
      _
    // Predicated region
    $region14: #{tpu_custom_call.1} parent=1 // pred_check
      _
    $region15: #{tpu_custom_call.1} parent=1 // pred_check_branch
      %31 = sbr.rel (0) target = $region17
    $region16: #{tpu_custom_call.1} parent=1 // pred_region
      %33 = vsyncadd [#allocation6], 0
      %s34 = sshll.u32 %s3, 4
      %s35 = int_to_ptr.hbm [resolvable:$true] %s34
      %s36 = sshll.u32 [#allocation5], 4
      %s37 = int_to_ptr.vmem [resolvable:$true] %s36
      %42 = dma.hbm_to_vmem [thread:$0]  %s35, 512, %s37, [#allocation6], 128, 128, 8
    $region17: #{tpu_custom_call.1} parent=1 // pred_fallthru
      _
    // Predicated region
    $region18: #{tpu_custom_call.1} parent=1 // pred_check
      _
    $region19: #{tpu_custom_call.1} parent=1 // pred_check_branch
      %44 = sbr.rel (0) target = $region21
    $region20: #{tpu_custom_call.1} parent=1 // pred_region
      _
    $region21: #{tpu_custom_call.1} parent=1 // pred_fallthru
      _
    // Predicated region
    $region22: #{tpu_custom_call.1} parent=1 // pred_check
      _
    $region23: #{tpu_custom_call.1} parent=1 // pred_check_branch
      %46 = sbr.rel (0) target = $region25
    $region24: #{tpu_custom_call.1} parent=1 // pred_region
      %48 = dma.done [#allocation3], 512
    $region25: #{tpu_custom_call.1} parent=1 // pred_fallthru
      _
    // Predicated region
    $region26: #{tpu_custom_call.1} parent=1 // pred_check
      _
    $region27: #{tpu_custom_call.1} parent=1 // pred_check_branch
      %50 = sbr.rel (0) target = $region29
    $region28: #{tpu_custom_call.1} parent=1 // pred_region
      %52 = dma.done [#allocation6], 512
    $region29: #{tpu_custom_call.1} parent=1 // pred_fallthru
      _
    %v53 = vld [vmem:[%s0] sm:$0xff]
    %v54 = vld [vmem:[%s0 + $0x8] sm:$0xff]
    %v55 = vld [vmem:[%s1] sm:$0xff]
    %v56 = vld [vmem:[%s1 + $0x8] sm:$0xff]
    %58 = vset.pattern.permute.xlu0 0
    %59 = vperm.xlu0 %58, %v53
    %v60 = vpop.permute.xlu0 %59
    %63 = vset.pattern.permute.xlu0 0
    %64 = vperm.xlu0 %63, %v54
    %v65 = vpop.permute.xlu0 %64
    %v67 = vperm.slane %v55, 0
    %v68 = vmul.f32 %v60, %v67
    %v69 = vmul.f32 %v65, %v67
    %70 = vset.pattern.permute.xlu0 1
    %71 = vperm.xlu0 %70, %v53
    %v72 = vpop.permute.xlu0 %71
    %74 = vset.pattern.permute.xlu0 1
    %75 = vperm.xlu0 %74, %v54
    %v76 = vpop.permute.xlu0 %75
    %v78 = vperm.slane %v55, 1
    %v79 = vmul.f32 %v72, %v78
    %v80 = vmul.f32 %v76, %v78
    %v81 = vadd.f32 %v68, %v79
    %v82 = vadd.f32 %v69, %v80
    %83 = vset.pattern.permute.xlu0 2
    %84 = vperm.xlu0 %83, %v53
    %v85 = vpop.permute.xlu0 %84
    %87 = vset.pattern.permute.xlu0 2
    %88 = vperm.xlu0 %87, %v54
    %v89 = vpop.permute.xlu0 %88
    %v91 = vperm.slane %v55, 2
    %v92 = vmul.f32 %v85, %v91
    %v93 = vmul.f32 %v89, %v91
    %v94 = vadd.f32 %v81, %v92
    %v95 = vadd.f32 %v82, %v93
    %v96 = vtanh.pop %v94
    %v97 = vtanh.pop %v95
    %v98 = vld [vmem:[#allocation2] sm:$0xff]
    %v99 = vld [vmem:[#allocation2 + $0x8] sm:$0xff]
    %v100 = vld [vmem:[#allocation2 + $0x10] sm:$0xff]
    %v101 = vld [vmem:[#allocation2 + $0x18] sm:$0xff]
    %v102 = vperm.slane %v55, 3
    %vm103 = vcmask 261120
    %v105 = vsel %vm103, %v96, 0
    %v108 = vsel %vm103, %v97, 0
    %110 = vmatpush.msra.mxu0 0.0
    %111 = vmatpush.msra.mxu0 0.0
    %112 = vmatpush.msra.mxu0 0.0
    %113 = vmatpush.msra.mxu0 0.0
    %114 = vmatpush.msra.mxu0 0.0
    %115 = vmatpush.msra.mxu0 0.0
    %116 = vmatpush.msra.mxu0 0.0
    %117 = vmatpush.msra.mxu0 0.0
    %118 = vmatpush.msra.mxu0 0.0
    %119 = vmatpush.msra.mxu0 0.0
    %120 = vmatpush.msra.mxu0 0.0
    %121 = vmatpush.msra.mxu0 0.0
    %122 = vmatpush.msra.mxu0 %v101
    %123 = vmatpush.msra.mxu0 %v100
    %124 = vmatpush.msra.mxu0 %v99
    %125 = vmatpush.msra.mxu0 %v98
    %126 = vmatmul.f32.gmra.mxu0 %v105
    %v127 = vpop.f32.mrf.mxu0
    %v128 = vadd.f32 %v102, %v127
    %129 = vmatmul.f32.gmra.mxu0 %v108
    %v130 = vpop.f32.mrf.mxu0
    %v131 = vadd.f32 %v102, %v130
    %132 = vdwg.mxu0
    %v133 = vtanh.pop %v128
    %v134 = vtanh.pop %v131
    %v135 = vsel %vm103, %v133, 0.0
    %136 = vadd.xlane.f32.xlu0 %v135
    %v137 = vpop.xlane.xlu0 %136
    %v138 = vsel %vm103, %v134, 0.0
    %139 = vadd.xlane.f32.xlu0 %v138
    %v140 = vpop.xlane.xlu0 %139
    %v141 = vrcp.pop 32.0
    %v142 = vmul.f32 32.0, %v141
    %v143 = vsub.f32 1.0, %v142
    %v144 = vmul.f32 %v141, %v143
    %v145 = vadd.f32 %v141, %v144
    %vm146 = vweird.f32 %v141
    %v147 = vsel %vm146, %v141, %v145
    %v148 = vmul.f32 %v137, %v147
    %v149 = vmul.f32 %v140, %v147
    %v150 = vsub.f32 %v133, %v148
    %v151 = vsub.f32 %v134, %v149
    %v152 = vmul.f32 %v150, %v150
    %v153 = vmul.f32 %v151, %v151
    %v154 = vsel %vm103, %v152, 0.0
    %155 = vadd.xlane.f32.xlu0 %v154
    %v156 = vpop.xlane.xlu0 %155
    %v157 = vsel %vm103, %v153, 0.0
    %158 = vadd.xlane.f32.xlu0 %v157
    %v159 = vpop.xlane.xlu0 %158
    %v160 = vmul.f32 %v156, %v147
    %v161 = vmul.f32 %v159, %v147
    %v162 = vadd.f32 %v160, 1e-05
    %v163 = vadd.f32 %v161, 1e-05
    %v164 = vrsqrt.pop %v162
    %v165 = vmul.f32 %v164, %v162
    %v166 = vmul.f32 %v165, %v164
    %v167 = vmul.f32 0.5, %v166
    %v168 = vsub.f32 1.5, %v167
    %v169 = vmul.f32 %v164, %v168
    %vm170 = vweird.f32 %v162
    %vm171 = vweird.f32 %v164
    %vm172 = vmor %vm170, %vm171
    %v173 = vsel %vm172, %v164, %v169
    %v174 = vrsqrt.pop %v163
    %v175 = vmul.f32 %v174, %v163
    %v176 = vmul.f32 %v175, %v174
    %v177 = vmul.f32 0.5, %v176
    %v178 = vsub.f32 1.5, %v177
    %v179 = vmul.f32 %v174, %v178
    %vm180 = vweird.f32 %v163
    %vm181 = vweird.f32 %v174
    %vm182 = vmor %vm180, %vm181
    %v183 = vsel %vm182, %v174, %v179
    %v184 = vmul.f32 %v150, %v173
    %v185 = vmul.f32 %v151, %v183
    %v186 = vperm.slane %v55, 4
    %v187 = vmul.f32 %v184, %v186
    %v188 = vmul.f32 %v185, %v186
    %v189 = vperm.slane %v55, 5
    %v190 = vadd.f32 %v187, %v189
    %v191 = vadd.f32 %v188, %v189
    %v192 = vld [vmem:[#allocation5] sm:$0xff]
    %v193 = vld [vmem:[#allocation5 + $0x8] sm:$0xff]
    %v194 = vld [vmem:[#allocation5 + $0x10] sm:$0xff]
    %v195 = vld [vmem:[#allocation5 + $0x18] sm:$0xff]
    %v196 = vperm.slane %v55, 6
    %v198 = vsel %vm103, %v190, 0
    %v201 = vsel %vm103, %v191, 0
    %203 = vmatpush.msra.mxu0 0.0
    %204 = vmatpush.msra.mxu0 0.0
    %205 = vmatpush.msra.mxu0 0.0
    %206 = vmatpush.msra.mxu0 0.0
    %207 = vmatpush.msra.mxu0 0.0
    %208 = vmatpush.msra.mxu0 0.0
    %209 = vmatpush.msra.mxu0 0.0
    %210 = vmatpush.msra.mxu0 0.0
    %211 = vmatpush.msra.mxu0 0.0
    %212 = vmatpush.msra.mxu0 0.0
    %213 = vmatpush.msra.mxu0 0.0
    %214 = vmatpush.msra.mxu0 0.0
    %215 = vmatpush.msra.mxu0 %v195
    %216 = vmatpush.msra.mxu0 %v194
    %217 = vmatpush.msra.mxu0 %v193
    %218 = vmatpush.msra.mxu0 %v192
    %219 = vmatmul.f32.gmra.mxu0 %v198
    %v220 = vpop.f32.mrf.mxu0
    %v221 = vadd.f32 %v196, %v220
    %222 = vmatmul.f32.gmra.mxu0 %v201
    %v223 = vpop.f32.mrf.mxu0
    %v224 = vadd.f32 %v196, %v223
    %225 = vdwg.mxu0
    %v226 = vtanh.pop %v221
    %v227 = vtanh.pop %v224
    %v228 = vsel %vm103, %v226, 0.0
    %229 = vadd.xlane.f32.xlu0 %v228
    %v230 = vpop.xlane.xlu0 %229
    %v231 = vsel %vm103, %v227, 0.0
    %232 = vadd.xlane.f32.xlu0 %v231
    %v233 = vpop.xlane.xlu0 %232
    %v234 = vmul.f32 %v230, %v147
    %v235 = vmul.f32 %v233, %v147
    %v236 = vsub.f32 %v226, %v234
    %v237 = vsub.f32 %v227, %v235
    %v238 = vmul.f32 %v236, %v236
    %v239 = vmul.f32 %v237, %v237
    %v240 = vsel %vm103, %v238, 0.0
    %241 = vadd.xlane.f32.xlu0 %v240
    %v242 = vpop.xlane.xlu0 %241
    %v243 = vsel %vm103, %v239, 0.0
    %244 = vadd.xlane.f32.xlu0 %v243
    %v245 = vpop.xlane.xlu0 %244
    %v246 = vmul.f32 %v242, %v147
    %v247 = vmul.f32 %v245, %v147
    %v248 = vadd.f32 %v246, 1e-05
    %v249 = vadd.f32 %v247, 1e-05
    %v250 = vrsqrt.pop %v248
    %v251 = vmul.f32 %v250, %v248
    %v252 = vmul.f32 %v251, %v250
    %v253 = vmul.f32 0.5, %v252
    %v254 = vsub.f32 1.5, %v253
    %v255 = vmul.f32 %v250, %v254
    %vm256 = vweird.f32 %v248
    %vm257 = vweird.f32 %v250
    %vm258 = vmor %vm256, %vm257
    %v259 = vsel %vm258, %v250, %v255
    %v260 = vrsqrt.pop %v249
    %v261 = vmul.f32 %v260, %v249
    %v262 = vmul.f32 %v261, %v260
    %v263 = vmul.f32 0.5, %v262
    %v264 = vsub.f32 1.5, %v263
    %v265 = vmul.f32 %v260, %v264
    %vm266 = vweird.f32 %v249
    %vm267 = vweird.f32 %v260
    %vm268 = vmor %vm266, %vm267
    %v269 = vsel %vm268, %v260, %v265
    %v270 = vmul.f32 %v236, %v259
    %v271 = vmul.f32 %v237, %v269
    %v272 = vperm.slane %v55, 7
    %v273 = vmul.f32 %v270, %v272
    %v274 = vmul.f32 %v271, %v272
    %v275 = vperm.slane %v56, 0
    %v276 = vadd.f32 %v273, %v275
    %v277 = vadd.f32 %v274, %v275
    %v278 = vld [vmem:[%s4] sm:$0xff]
    %280 = vset.pattern.permute.xlu0 0
    %281 = vperm.xlu0 %280, %v278
    %v282 = vpop.permute.xlu0 %281
    %v284 = vmul.f32 %v276, %v282
    %v285 = vmul.f32 %v277, %v282
    %v286 = vsel %vm103, %v284, 0.0
    %v287 = vrot.slane %v286, 4
    %v288 = vadd.f32 %v286, %v287
    %v289 = vrot.slane %v288, 2
    %v290 = vadd.f32 %v288, %v289
    %v291 = vrot.slane %v290, 1
    %v292 = vadd.f32 %v290, %v291
    %v293 = vsel %vm103, %v285, 0.0
    %v294 = vrot.slane %v293, 4
    %v295 = vadd.f32 %v293, %v294
    %v296 = vrot.slane %v295, 2
    %v297 = vadd.f32 %v295, %v296
    %v298 = vrot.slane %v297, 1
    %v299 = vadd.f32 %v297, %v298
    %vm302 = vcmask 1041409
    %v303 = vsel %vm302, %v299, %v292
    %vm305 = vcmask 254976
    %306 = vst.msk [vmem:[#allocation7] sm:$0x3] %vm305, %v303
    // Predicated region
    $region30: #{tpu_custom_call.1} parent=1 // pred_check
      _
    $region31: #{tpu_custom_call.1} parent=1 // pred_check_branch
      %308 = sbr.rel (0) target = $region33
    $region32: #{tpu_custom_call.1} parent=1 // pred_region
      %310 = vsyncadd [#allocation4], 0
      %s312 = sshll.u32 [#allocation7], 4
      %s313 = int_to_ptr.vmem [resolvable:$true] %s312
      %s314 = sshll.u32 %s5, 4
      %s315 = int_to_ptr.hbm [resolvable:$true] %s314
      %317 = dma.vmem_to_hbm [thread:$0]  %s313, 32, %s315, [#allocation4]
    $region33: #{tpu_custom_call.1} parent=1 // pred_fallthru
      _
    // Predicated region
    $region34: #{tpu_custom_call.1} parent=1 // pred_check
      _
    $region35: #{tpu_custom_call.1} parent=1 // pred_check_branch
      %319 = sbr.rel (0) target = $region37
    $region36: #{tpu_custom_call.1} parent=1 // pred_region
      %321 = dma.done [#allocation4], 32
    $region37: #{tpu_custom_call.1} parent=1 // pred_fallthru
      _
    %322 = vsyncpa [#allocation3], 1
    %323 = vsyncpa [#allocation6], 1
    %324 = vsyncpa [#allocation4], 1

</llo_original>
